<compile_context>
chip_gen: v7x
topology: tpu7x:2x2x1
jax: 0.10.0
libtpu: 0.0.40
codegen_flags: <defaults>
</compile_context>

<pallas_src>
import functools

import jax
import jax.numpy as jnp
from jax.experimental import pallas as pl
from jax.experimental.pallas import tpu as pltpu


def _round_up(x, m):
    return ((x + m - 1) // m) * m


def _elu_f32(x):
    # ELU with alpha=1.0 (PyTorch default), computed in f32.
    # exp() maps to the dedicated EUP slot so it overlaps with MXU work.
    # TODO(synk): switch to jnp.expm1 once confirmed in the Mosaic lowering set
    # (difference vs exp(x)-1 is < 1.2e-7 absolute, negligible here).
    return jnp.where(x > 0.0, x, jnp.exp(x) - 1.0)


def _make_odenet_kernel(num_residual_blocks, compute_dtype):
    """kernel(x_ref, w_in, b_in, [w1,b1,w2,b2]*B, w_out, b_out, out_ref)."""

    def kernel(x_ref, *refs):
        out_ref = refs[-1]
        params = refs[:-1]

        # x arrives already in the compute dtype (bf16); activations stay f32,
        # only matmul operands are cast so the MXU runs at native rate with
        # f32 accumulation.
        x = x_ref[...]

        w_in, b_in = params[0], params[1]
        h = jnp.dot(x, w_in[...],
                    preferred_element_type=jnp.float32) + b_in[...]

        idx = 2
        for _ in range(num_residual_blocks):
            w1, b1 = params[idx], params[idx + 1]
            w2, b2 = params[idx + 2], params[idx + 3]
            idx += 4
            t = jnp.dot(h.astype(compute_dtype), w1[...],
                        preferred_element_type=jnp.float32) + b1[...]
            t = _elu_f32(t)
            t = jnp.dot(t.astype(compute_dtype), w2[...],
                        preferred_element_type=jnp.float32) + b2[...]
            h = h + t

        w_out, b_out = params[idx], params[idx + 1]
        y = jnp.dot(h.astype(compute_dtype), w_out[...],
                    preferred_element_type=jnp.float32) + b_out[...]

        out_ref[...] = y.astype(out_ref.dtype)

    return kernel


def init_odenet_params(key, n, num_residual_blocks, hidden_features):
    """PyTorch-nn.Linear-style init (uniform +/- 1/sqrt(fan_in)).

    Weights are stored transposed, shape (in_features, out_features).
    Biases are stored as (1, out_features).
    Returns a flat list: [w_in, b_in] + [w1, b1, w2, b2]*blocks + [w_out, b_out].
    """
    def linear(k, fan_in, fan_out):
        kw, kb = jax.random.split(k)
        bound = 1.0 / jnp.sqrt(jnp.float32(fan_in))
        w = jax.random.uniform(kw, (fan_in, fan_out), jnp.float32, -bound, bound)
        b = jax.random.uniform(kb, (1, fan_out), jnp.float32, -bound, bound)
        return w, b

    params = []
    keys = jax.random.split(key, 2 + 2 * num_residual_blocks)
    ki = 0

    w, b = linear(keys[ki], n, hidden_features); ki += 1
    params += [w, b]
    for _ in range(num_residual_blocks):
        w1, b1 = linear(keys[ki], hidden_features, hidden_features); ki += 1
        w2, b2 = linear(keys[ki], hidden_features, hidden_features); ki += 1
        params += [w1, b1, w2, b2]
    w, b = linear(keys[ki], hidden_features, n); ki += 1
    params += [w, b]
    return params


def odenet_forward_pallas(x, params, num_residual_blocks, *,
                          compute_dtype=jnp.bfloat16, block_batch=1024):
    batch, n = x.shape
    hidden = params[0].shape[1]

    # Lane-pad feature dims to 128; zero padding preserves semantics (padded
    # hidden lanes stay exactly zero through all layers: bias pad = 0,
    # ELU(0) = 0, residual of 0 stays 0, padded output rows contribute 0).
    n_pad = _round_up(n, 128)
    h_pad = _round_up(hidden, 128)

    # Batch tile: multiple of 8 sublanes; 1-D grid over batch tiles.
    batch_pad = _round_up(batch, 8)
    tb = _round_up(min(block_batch, batch_pad), 8)
    batch_pad = _round_up(batch_pad, tb)
    grid = (pl.cdiv(batch_pad, tb),)

    # x stored in compute dtype: identical math (kernel casts operands to bf16
    # before the first matmul either way) but half the input-tile DMA bytes.
    x_p = jnp.zeros((batch_pad, n_pad), compute_dtype)
    x_p = x_p.at[:batch, :n].set(x.astype(compute_dtype))

    def pad2(a, rows, cols, dtype):
        z = jnp.zeros((rows, cols), dtype)
        return z.at[: a.shape[0], : a.shape[1]].set(a.astype(dtype))

    # Weights in bf16 (MXU operands), biases in f32 (added post-accumulation).
    pp = [pad2(params[0], n_pad, h_pad, compute_dtype),
          pad2(params[1], 1, h_pad, jnp.float32)]
    idx = 2
    for _ in range(num_residual_blocks):
        pp.append(pad2(params[idx + 0], h_pad, h_pad, compute_dtype))
        pp.append(pad2(params[idx + 1], 1, h_pad, jnp.float32))
        pp.append(pad2(params[idx + 2], h_pad, h_pad, compute_dtype))
        pp.append(pad2(params[idx + 3], 1, h_pad, jnp.float32))
        idx += 4
    pp.append(pad2(params[idx + 0], h_pad, n_pad, compute_dtype))
    pp.append(pad2(params[idx + 1], 1, n_pad, jnp.float32))

    # x/out tiled over batch; weights/biases use constant index_maps so they
    # stay VMEM-resident across all grid steps (no re-DMA).
    x_spec = pl.BlockSpec((tb, n_pad), lambda i: (i, 0))
    out_spec = pl.BlockSpec((tb, n_pad), lambda i: (i, 0))
    param_specs = [pl.BlockSpec(p.shape, lambda i: (0, 0)) for p in pp]

    # Advisory cost estimate so XLA schedules around the custom call sensibly.
    flops = 2 * batch_pad * (2 * n_pad * h_pad
                             + 2 * num_residual_blocks * h_pad * h_pad)
    transcendentals = batch_pad * num_residual_blocks * h_pad
    param_bytes = sum(int(p.size) * p.dtype.itemsize for p in pp)
    bytes_accessed = (param_bytes
                      + int(x_p.size) * x_p.dtype.itemsize   # bf16 input
                      + batch_pad * n_pad * 4)               # f32 output
    cost = pl.CostEstimate(flops=flops, transcendentals=transcendentals,
                           bytes_accessed=bytes_accessed)

    # VMEM budget: resident params (x2 for Pallas buffering) + double-buffered
    # x/out tiles + activation temporaries, clamped to the v7x physical limit
    # (64 MiB) for portability.
    vmem_bytes = (2 * param_bytes
                  + 2 * tb * n_pad * 2          # x tiles (bf16), double-buffered
                  + 2 * tb * n_pad * 4          # out tiles (f32), double-buffered
                  + 8 * tb * h_pad * 4          # activation temporaries
                  + (4 << 20))                  # headroom
    vmem_bytes = int(min(max(vmem_bytes, 32 << 20), 64 << 20))

    kernel = _make_odenet_kernel(num_residual_blocks, compute_dtype)
    out_p = pl.pallas_call(
        kernel,
        out_shape=jax.ShapeDtypeStruct((batch_pad, n_pad), jnp.float32),
        grid=grid,
        in_specs=[x_spec] + param_specs,
        out_specs=out_spec,
        compiler_params=pltpu.CompilerParams(
            dimension_semantics=("parallel",),   # shard batch tiles across TCs
            vmem_limit_bytes=vmem_bytes),
        cost_estimate=cost,
    )(x_p, *pp)

    return out_p[:batch, :n].astype(x.dtype)


def odenet_forward_ref(x, params, num_residual_blocks):
    """Pure-JAX f32 reference matching the PyTorch module semantics."""
    w_in, b_in = params[0], params[1]
    h = x @ w_in + b_in
    idx = 2
    for _ in range(num_residual_blocks):
        w1, b1, w2, b2 = params[idx:idx + 4]
        idx += 4
        t = h @ w1 + b1
        t = _elu_f32(t)
        t = t @ w2 + b2
        h = h + t
    w_out, b_out = params[idx], params[idx + 1]
    return h @ w_out + b_out


def odenet_forward_mixed_ref(x, params, num_residual_blocks,
                             compute_dtype=jnp.bfloat16):
    """Pure-JAX reference with the same bf16-operand / f32-accumulate math."""
    def mm(a, w):
        return jnp.dot(a.astype(compute_dtype), w.astype(compute_dtype),
                       preferred_element_type=jnp.float32)

    w_in, b_in = params[0], params[1]
    h = mm(x, w_in) + b_in
    idx = 2
    for _ in range(num_residual_blocks):
        w1, b1, w2, b2 = params[idx:idx + 4]
        idx += 4
        t = mm(h, w1) + b1
        t = _elu_f32(t)
        t = mm(t, w2) + b2
        h = h + t
    w_out, b_out = params[idx], params[idx + 1]
    return mm(h, w_out) + b_out


if __name__ == "__main__":
    # Small shapes consistent with ODENet(n, num_residual_blocks, hidden_features)
    batch = 8
    n = 4
    num_residual_blocks = 2
    hidden_features = 32

    key = jax.random.PRNGKey(0)
    kx, kp = jax.random.split(key)
    x = jax.random.normal(kx, (batch, n), dtype=jnp.float32)
    params = init_odenet_params(kp, n, num_residual_blocks, hidden_features)

    fwd = jax.jit(functools.partial(odenet_forward_pallas,
                                    num_residual_blocks=num_residual_blocks))
    y = jax.block_until_ready(fwd(x, params))
    assert y.shape == (batch, n)

    # Tight check vs a reference using the same mixed precision...
    y_mixed = odenet_forward_mixed_ref(x, params, num_residual_blocks)
    assert jnp.allclose(y, y_mixed, atol=1e-3, rtol=1e-3), \
        "Pallas output mismatch vs mixed-precision reference"
    # ...and a looser check vs the full-f32 module semantics.
    y_f32 = odenet_forward_ref(x, params, num_residual_blocks)
    assert jnp.allclose(y, y_f32, atol=5e-2, rtol=5e-2), \
        "Pallas output mismatch vs f32 reference"

    print("KERNEL_OK")
</pallas_src>

<mosaic_0001>
module attributes {stable_mosaic.version = 11 : i64} {
  func.func @kernel(%arg0: i32, %arg1: memref<8x128xbf16, #tpu.memory_space<vmem>>, %arg2: memref<128x128xbf16, #tpu.memory_space<vmem>>, %arg3: memref<1x128xf32, #tpu.memory_space<vmem>>, %arg4: memref<128x128xbf16, #tpu.memory_space<vmem>>, %arg5: memref<1x128xf32, #tpu.memory_space<vmem>>, %arg6: memref<128x128xbf16, #tpu.memory_space<vmem>>, %arg7: memref<1x128xf32, #tpu.memory_space<vmem>>, %arg8: memref<128x128xbf16, #tpu.memory_space<vmem>>, %arg9: memref<1x128xf32, #tpu.memory_space<vmem>>, %arg10: memref<128x128xbf16, #tpu.memory_space<vmem>>, %arg11: memref<1x128xf32, #tpu.memory_space<vmem>>, %arg12: memref<128x128xbf16, #tpu.memory_space<vmem>>, %arg13: memref<1x128xf32, #tpu.memory_space<vmem>>, %arg14: memref<8x128xf32, #tpu.memory_space<vmem>>) attributes {dimension_semantics = [#tpu.dimension_semantics<parallel>], iteration_bounds = array<i64: 1>, scalar_prefetch = 0 : i64, scratch_operands = 0 : i64, tpu.core_type = #tpu.core_type<tc>, window_params = [{transform_indices = @transform_0, window_bounds = array<i64: 8, 128>}, {pipeline_mode = #tpu.pipeline_mode<synchronous>, transform_indices = @transform_1, window_bounds = array<i64: 128, 128>}, {pipeline_mode = #tpu.pipeline_mode<synchronous>, transform_indices = @transform_2, window_bounds = array<i64: 1, 128>}, {pipeline_mode = #tpu.pipeline_mode<synchronous>, transform_indices = @transform_3, window_bounds = array<i64: 128, 128>}, {pipeline_mode = #tpu.pipeline_mode<synchronous>, transform_indices = @transform_4, window_bounds = array<i64: 1, 128>}, {pipeline_mode = #tpu.pipeline_mode<synchronous>, transform_indices = @transform_5, window_bounds = array<i64: 128, 128>}, {pipeline_mode = #tpu.pipeline_mode<synchronous>, transform_indices = @transform_6, window_bounds = array<i64: 1, 128>}, {pipeline_mode = #tpu.pipeline_mode<synchronous>, transform_indices = @transform_7, window_bounds = array<i64: 128, 128>}, {pipeline_mode = #tpu.pipeline_mode<synchronous>, transform_indices = @transform_8, window_bounds = array<i64: 1, 128>}, {pipeline_mode = #tpu.pipeline_mode<synchronous>, transform_indices = @transform_9, window_bounds = array<i64: 128, 128>}, {pipeline_mode = #tpu.pipeline_mode<synchronous>, transform_indices = @transform_10, window_bounds = array<i64: 1, 128>}, {pipeline_mode = #tpu.pipeline_mode<synchronous>, transform_indices = @transform_11, window_bounds = array<i64: 128, 128>}, {pipeline_mode = #tpu.pipeline_mode<synchronous>, transform_indices = @transform_12, window_bounds = array<i64: 1, 128>}, {transform_indices = @transform_13, window_bounds = array<i64: 8, 128>}]} {
    %c0 = arith.constant 0 : index
    %c0_0 = arith.constant 0 : index
    %0 = vector.load %arg1[%c0, %c0_0] : memref<8x128xbf16, #tpu.memory_space<vmem>>, vector<8x128xbf16>
    %c0_1 = arith.constant 0 : index
    %c0_2 = arith.constant 0 : index
    %1 = vector.load %arg2[%c0_1, %c0_2] : memref<128x128xbf16, #tpu.memory_space<vmem>>, vector<128x128xbf16>
    %cst = arith.constant dense<0.000000e+00> : vector<8x128xf32>
    %2 = tpu.matmul %0, %1, %cst {dimension_numbers = #tpu.dot_dimension_numbers<[1], [0], [0], [1], [0, 0, 1, 1], [], []>} : vector<8x128xbf16>, vector<128x128xbf16>, vector<8x128xf32> -> vector<8x128xf32>
    %c0_3 = arith.constant 0 : index
    %c0_4 = arith.constant 0 : index
    %3 = vector.load %arg3[%c0_3, %c0_4] : memref<1x128xf32, #tpu.memory_space<vmem>>, vector<1x128xf32>
    %4 = vector.broadcast %3 : vector<1x128xf32> to vector<8x128xf32>
    %5 = arith.addf %2, %4 : vector<8x128xf32>
    %6 = arith.truncf %5 : vector<8x128xf32> to vector<8x128xbf16>
    %c0_5 = arith.constant 0 : index
    %c0_6 = arith.constant 0 : index
    %7 = vector.load %arg4[%c0_5, %c0_6] : memref<128x128xbf16, #tpu.memory_space<vmem>>, vector<128x128xbf16>
    %cst_7 = arith.constant dense<0.000000e+00> : vector<8x128xf32>
    %8 = tpu.matmul %6, %7, %cst_7 {dimension_numbers = #tpu.dot_dimension_numbers<[1], [0], [0], [1], [0, 0, 1, 1], [], []>} : vector<8x128xbf16>, vector<128x128xbf16>, vector<8x128xf32> -> vector<8x128xf32>
    %c0_8 = arith.constant 0 : index
    %c0_9 = arith.constant 0 : index
    %9 = vector.load %arg5[%c0_8, %c0_9] : memref<1x128xf32, #tpu.memory_space<vmem>>, vector<1x128xf32>
    %10 = vector.broadcast %9 : vector<1x128xf32> to vector<8x128xf32>
    %11 = arith.addf %8, %10 : vector<8x128xf32>
    %cst_10 = arith.constant 0.000000e+00 : f32
    %12 = vector.broadcast %cst_10 : f32 to vector<8x128xf32>
    %13 = arith.cmpf ogt, %11, %12 : vector<8x128xf32>
    %14 = math.exp %11 : vector<8x128xf32>
    %cst_11 = arith.constant 1.000000e+00 : f32
    %15 = vector.broadcast %cst_11 : f32 to vector<8x128xf32>
    %16 = arith.subf %14, %15 : vector<8x128xf32>
    %17 = arith.select %13, %11, %16 : vector<8x128xi1>, vector<8x128xf32>
    %18 = arith.truncf %17 : vector<8x128xf32> to vector<8x128xbf16>
    %c0_12 = arith.constant 0 : index
    %c0_13 = arith.constant 0 : index
    %19 = vector.load %arg6[%c0_12, %c0_13] : memref<128x128xbf16, #tpu.memory_space<vmem>>, vector<128x128xbf16>
    %cst_14 = arith.constant dense<0.000000e+00> : vector<8x128xf32>
    %20 = tpu.matmul %18, %19, %cst_14 {dimension_numbers = #tpu.dot_dimension_numbers<[1], [0], [0], [1], [0, 0, 1, 1], [], []>} : vector<8x128xbf16>, vector<128x128xbf16>, vector<8x128xf32> -> vector<8x128xf32>
    %c0_15 = arith.constant 0 : index
    %c0_16 = arith.constant 0 : index
    %21 = vector.load %arg7[%c0_15, %c0_16] : memref<1x128xf32, #tpu.memory_space<vmem>>, vector<1x128xf32>
    %22 = vector.broadcast %21 : vector<1x128xf32> to vector<8x128xf32>
    %23 = arith.addf %20, %22 : vector<8x128xf32>
    %24 = arith.addf %5, %23 : vector<8x128xf32>
    %25 = arith.truncf %24 : vector<8x128xf32> to vector<8x128xbf16>
    %c0_17 = arith.constant 0 : index
    %c0_18 = arith.constant 0 : index
    %26 = vector.load %arg8[%c0_17, %c0_18] : memref<128x128xbf16, #tpu.memory_space<vmem>>, vector<128x128xbf16>
    %cst_19 = arith.constant dense<0.000000e+00> : vector<8x128xf32>
    %27 = tpu.matmul %25, %26, %cst_19 {dimension_numbers = #tpu.dot_dimension_numbers<[1], [0], [0], [1], [0, 0, 1, 1], [], []>} : vector<8x128xbf16>, vector<128x128xbf16>, vector<8x128xf32> -> vector<8x128xf32>
    %c0_20 = arith.constant 0 : index
    %c0_21 = arith.constant 0 : index
    %28 = vector.load %arg9[%c0_20, %c0_21] : memref<1x128xf32, #tpu.memory_space<vmem>>, vector<1x128xf32>
    %29 = vector.broadcast %28 : vector<1x128xf32> to vector<8x128xf32>
    %30 = arith.addf %27, %29 : vector<8x128xf32>
    %cst_22 = arith.constant 0.000000e+00 : f32
    %31 = vector.broadcast %cst_22 : f32 to vector<8x128xf32>
    %32 = arith.cmpf ogt, %30, %31 : vector<8x128xf32>
    %33 = math.exp %30 : vector<8x128xf32>
    %cst_23 = arith.constant 1.000000e+00 : f32
    %34 = vector.broadcast %cst_23 : f32 to vector<8x128xf32>
    %35 = arith.subf %33, %34 : vector<8x128xf32>
    %36 = arith.select %32, %30, %35 : vector<8x128xi1>, vector<8x128xf32>
    %37 = arith.truncf %36 : vector<8x128xf32> to vector<8x128xbf16>
    %c0_24 = arith.constant 0 : index
    %c0_25 = arith.constant 0 : index
    %38 = vector.load %arg10[%c0_24, %c0_25] : memref<128x128xbf16, #tpu.memory_space<vmem>>, vector<128x128xbf16>
    %cst_26 = arith.constant dense<0.000000e+00> : vector<8x128xf32>
    %39 = tpu.matmul %37, %38, %cst_26 {dimension_numbers = #tpu.dot_dimension_numbers<[1], [0], [0], [1], [0, 0, 1, 1], [], []>} : vector<8x128xbf16>, vector<128x128xbf16>, vector<8x128xf32> -> vector<8x128xf32>
    %c0_27 = arith.constant 0 : index
    %c0_28 = arith.constant 0 : index
    %40 = vector.load %arg11[%c0_27, %c0_28] : memref<1x128xf32, #tpu.memory_space<vmem>>, vector<1x128xf32>
    %41 = vector.broadcast %40 : vector<1x128xf32> to vector<8x128xf32>
    %42 = arith.addf %39, %41 : vector<8x128xf32>
    %43 = arith.addf %24, %42 : vector<8x128xf32>
    %44 = arith.truncf %43 : vector<8x128xf32> to vector<8x128xbf16>
    %c0_29 = arith.constant 0 : index
    %c0_30 = arith.constant 0 : index
    %45 = vector.load %arg12[%c0_29, %c0_30] : memref<128x128xbf16, #tpu.memory_space<vmem>>, vector<128x128xbf16>
    %cst_31 = arith.constant dense<0.000000e+00> : vector<8x128xf32>
    %46 = tpu.matmul %44, %45, %cst_31 {dimension_numbers = #tpu.dot_dimension_numbers<[1], [0], [0], [1], [0, 0, 1, 1], [], []>} : vector<8x128xbf16>, vector<128x128xbf16>, vector<8x128xf32> -> vector<8x128xf32>
    %c0_32 = arith.constant 0 : index
    %c0_33 = arith.constant 0 : index
    %47 = vector.load %arg13[%c0_32, %c0_33] : memref<1x128xf32, #tpu.memory_space<vmem>>, vector<1x128xf32>
    %48 = vector.broadcast %47 : vector<1x128xf32> to vector<8x128xf32>
    %49 = arith.addf %46, %48 : vector<8x128xf32>
    %c0_34 = arith.constant 0 : index
    %c0_35 = arith.constant 0 : index
    %50 = vector.load %arg14[%c0_34, %c0_35] : memref<8x128xf32, #tpu.memory_space<vmem>>, vector<8x128xf32>
    tpu.vector_store %arg14[%c0_34, %c0_35], %49 {strides = array<i32>} : memref<8x128xf32, #tpu.memory_space<vmem>>, vector<8x128xf32>,
    return
  }
  func.func @transform_0(%arg0: i32) -> (i32, i32) {
    %c0_i32 = arith.constant 0 : i32
    %c0_i32_0 = arith.constant 0 : i32
    return %arg0, %c0_i32 : i32, i32
  }
  func.func @transform_1(%arg0: i32) -> (i32, i32) {
    %c0_i32 = arith.constant 0 : i32
    %c0_i32_0 = arith.constant 0 : i32
    %c0_i32_1 = arith.constant 0 : i32
    return %c0_i32, %c0_i32_0 : i32, i32
  }
  func.func @transform_2(%arg0: i32) -> (i32, i32) {
    %c0_i32 = arith.constant 0 : i32
    %c0_i32_0 = arith.constant 0 : i32
    %c0_i32_1 = arith.constant 0 : i32
    return %c0_i32, %c0_i32_0 : i32, i32
  }
  func.func @transform_3(%arg0: i32) -> (i32, i32) {
    %c0_i32 = arith.constant 0 : i32
    %c0_i32_0 = arith.constant 0 : i32
    %c0_i32_1 = arith.constant 0 : i32
    return %c0_i32, %c0_i32_0 : i32, i32
  }
  func.func @transform_4(%arg0: i32) -> (i32, i32) {
    %c0_i32 = arith.constant 0 : i32
    %c0_i32_0 = arith.constant 0 : i32
    %c0_i32_1 = arith.constant 0 : i32
    return %c0_i32, %c0_i32_0 : i32, i32
  }
  func.func @transform_5(%arg0: i32) -> (i32, i32) {
    %c0_i32 = arith.constant 0 : i32
    %c0_i32_0 = arith.constant 0 : i32
    %c0_i32_1 = arith.constant 0 : i32
    return %c0_i32, %c0_i32_0 : i32, i32
  }
  func.func @transform_6(%arg0: i32) -> (i32, i32) {
    %c0_i32 = arith.constant 0 : i32
    %c0_i32_0 = arith.constant 0 : i32
    %c0_i32_1 = arith.constant 0 : i32
    return %c0_i32, %c0_i32_0 : i32, i32
  }
  func.func @transform_7(%arg0: i32) -> (i32, i32) {
    %c0_i32 = arith.constant 0 : i32
    %c0_i32_0 = arith.constant 0 : i32
    %c0_i32_1 = arith.constant 0 : i32
    return %c0_i32, %c0_i32_0 : i32, i32
  }
  func.func @transform_8(%arg0: i32) -> (i32, i32) {
    %c0_i32 = arith.constant 0 : i32
    %c0_i32_0 = arith.constant 0 : i32
    %c0_i32_1 = arith.constant 0 : i32
    return %c0_i32, %c0_i32_0 : i32, i32
  }
  func.func @transform_9(%arg0: i32) -> (i32, i32) {
    %c0_i32 = arith.constant 0 : i32
    %c0_i32_0 = arith.constant 0 : i32
    %c0_i32_1 = arith.constant 0 : i32
    return %c0_i32, %c0_i32_0 : i32, i32
  }
  func.func @transform_10(%arg0: i32) -> (i32, i32) {
    %c0_i32 = arith.constant 0 : i32
    %c0_i32_0 = arith.constant 0 : i32
    %c0_i32_1 = arith.constant 0 : i32
    return %c0_i32, %c0_i32_0 : i32, i32
  }
  func.func @transform_11(%arg0: i32) -> (i32, i32) {
    %c0_i32 = arith.constant 0 : i32
    %c0_i32_0 = arith.constant 0 : i32
    %c0_i32_1 = arith.constant 0 : i32
    return %c0_i32, %c0_i32_0 : i32, i32
  }
  func.func @transform_12(%arg0: i32) -> (i32, i32) {
    %c0_i32 = arith.constant 0 : i32
    %c0_i32_0 = arith.constant 0 : i32
    %c0_i32_1 = arith.constant 0 : i32
    return %c0_i32, %c0_i32_0 : i32, i32
  }
  func.func @transform_13(%arg0: i32) -> (i32, i32) {
    %c0_i32 = arith.constant 0 : i32
    %c0_i32_0 = arith.constant 0 : i32
    return %arg0, %c0_i32 : i32, i32
  }
}

</mosaic_0001>

<llo_original>
// kernel: odenet_forward_pallas.1
$region0: #{odenet_forward_pallas.1}
  #allocation0 [shape = 'u32[]', space=smem, size = 0x4, offset = 0x4, fixed_abs, tag = 'smem constant byte address 0x4 - core index']
  #allocation1 [shape = 'u32[144,128]{1,0:T(1,128)}', space=vmem, size = 0x12000, scoped, tag = 'internal scratch']
  %s0 = inlined_call_operand.vmem [shape: bf16[8,128], index: 0, kind: input, shape index: {}]
  %s1 = inlined_call_operand.vmem [shape: bf16[128,128], index: 1, kind: input, shape index: {}]
  %s2 = inlined_call_operand.vmem [shape: f32[1,128], index: 2, kind: input, shape index: {}]
  %s3 = inlined_call_operand.vmem [shape: bf16[128,128], index: 3, kind: input, shape index: {}]
  %s4 = inlined_call_operand.vmem [shape: f32[1,128], index: 4, kind: input, shape index: {}]
  %s5 = inlined_call_operand.vmem [shape: bf16[128,128], index: 5, kind: input, shape index: {}]
  %s6 = inlined_call_operand.vmem [shape: f32[1,128], index: 6, kind: input, shape index: {}]
  %s7 = inlined_call_operand.vmem [shape: bf16[128,128], index: 7, kind: input, shape index: {}]
  %s8 = inlined_call_operand.vmem [shape: f32[1,128], index: 8, kind: input, shape index: {}]
  %s9 = inlined_call_operand.vmem [shape: bf16[128,128], index: 9, kind: input, shape index: {}]
  %s10 = inlined_call_operand.vmem [shape: f32[1,128], index: 10, kind: input, shape index: {}]
  %s11 = inlined_call_operand.vmem [shape: bf16[128,128], index: 11, kind: input, shape index: {}]
  %s12 = inlined_call_operand.vmem [shape: f32[1,128], index: 12, kind: input, shape index: {}]
  %s13 = inlined_call_operand.vmem [shape: f32[8,128], index: 13, kind: output, shape index: {}]
  %s14 = sld [smem:[#allocation0]]
  $region62: #{odenet_forward_pallas.1} parent=0
    _
  %s16 = ssub.s32 1, %s14
  %s17 = scalar_select 0, %s16, %s14
  // Predicated region
  $region2: #{odenet_forward_pallas.1} parent=0 // pred_check
    _
  $region3: #{odenet_forward_pallas.1} parent=0 // pred_check_branch
    %19 = sbr.rel (0) target = $region5
  $region4: #{odenet_forward_pallas.1} parent=0 // pred_region
    _
  $region5: #{odenet_forward_pallas.1} parent=0 // pred_fallthru
    _
  // Predicated region
  $region6: #{odenet_forward_pallas.1} parent=0 // pred_check
    _
  $region7: #{odenet_forward_pallas.1} parent=0 // pred_check_branch
    %21 = sbr.rel (0) target = $region9
  $region8: #{odenet_forward_pallas.1} parent=0 // pred_region
    _
  $region9: #{odenet_forward_pallas.1} parent=0 // pred_fallthru
    _
  // Predicated region
  $region10: #{odenet_forward_pallas.1} parent=0 // pred_check
    _
  $region11: #{odenet_forward_pallas.1} parent=0 // pred_check_branch
    %23 = sbr.rel (0) target = $region13
  $region12: #{odenet_forward_pallas.1} parent=0 // pred_region
    _
  $region13: #{odenet_forward_pallas.1} parent=0 // pred_fallthru
    _
  // Predicated region
  $region14: #{odenet_forward_pallas.1} parent=0 // pred_check
    _
  $region15: #{odenet_forward_pallas.1} parent=0 // pred_check_branch
    %25 = sbr.rel (0) target = $region17
  $region16: #{odenet_forward_pallas.1} parent=0 // pred_region
    _
  $region17: #{odenet_forward_pallas.1} parent=0 // pred_fallthru
    _
  // Predicated region
  $region18: #{odenet_forward_pallas.1} parent=0 // pred_check
    _
  $region19: #{odenet_forward_pallas.1} parent=0 // pred_check_branch
    %27 = sbr.rel (0) target = $region21
  $region20: #{odenet_forward_pallas.1} parent=0 // pred_region
    _
  $region21: #{odenet_forward_pallas.1} parent=0 // pred_fallthru
    _
  // Predicated region
  $region22: #{odenet_forward_pallas.1} parent=0 // pred_check
    _
  $region23: #{odenet_forward_pallas.1} parent=0 // pred_check_branch
    %29 = sbr.rel (0) target = $region25
  $region24: #{odenet_forward_pallas.1} parent=0 // pred_region
    _
  $region25: #{odenet_forward_pallas.1} parent=0 // pred_fallthru
    _
  // Predicated region
  $region26: #{odenet_forward_pallas.1} parent=0 // pred_check
    _
  $region27: #{odenet_forward_pallas.1} parent=0 // pred_check_branch
    %31 = sbr.rel (0) target = $region29
  $region28: #{odenet_forward_pallas.1} parent=0 // pred_region
    _
  $region29: #{odenet_forward_pallas.1} parent=0 // pred_fallthru
    _
  // Predicated region
  $region30: #{odenet_forward_pallas.1} parent=0 // pred_check
    _
  $region31: #{odenet_forward_pallas.1} parent=0 // pred_check_branch
    %33 = sbr.rel (0) target = $region33
  $region32: #{odenet_forward_pallas.1} parent=0 // pred_region
    _
  $region33: #{odenet_forward_pallas.1} parent=0 // pred_fallthru
    _
  // Predicated region
  $region34: #{odenet_forward_pallas.1} parent=0 // pred_check
    _
  $region35: #{odenet_forward_pallas.1} parent=0 // pred_check_branch
    %35 = sbr.rel (0) target = $region37
  $region36: #{odenet_forward_pallas.1} parent=0 // pred_region
    _
  $region37: #{odenet_forward_pallas.1} parent=0 // pred_fallthru
    _
  // Predicated region
  $region38: #{odenet_forward_pallas.1} parent=0 // pred_check
    _
  $region39: #{odenet_forward_pallas.1} parent=0 // pred_check_branch
    %37 = sbr.rel (0) target = $region41
  $region40: #{odenet_forward_pallas.1} parent=0 // pred_region
    _
  $region41: #{odenet_forward_pallas.1} parent=0 // pred_fallthru
    _
  // Predicated region
  $region42: #{odenet_forward_pallas.1} parent=0 // pred_check
    _
  $region43: #{odenet_forward_pallas.1} parent=0 // pred_check_branch
    %39 = sbr.rel (0) target = $region45
  $region44: #{odenet_forward_pallas.1} parent=0 // pred_region
    _
  $region45: #{odenet_forward_pallas.1} parent=0 // pred_fallthru
    _
  // Predicated region
  $region46: #{odenet_forward_pallas.1} parent=0 // pred_check
    _
  $region47: #{odenet_forward_pallas.1} parent=0 // pred_check_branch
    %41 = sbr.rel (0) target = $region49
  $region48: #{odenet_forward_pallas.1} parent=0 // pred_region
    _
  $region49: #{odenet_forward_pallas.1} parent=0 // pred_fallthru
    _
  // Predicated region
  $region50: #{odenet_forward_pallas.1} parent=0 // pred_check
    _
  $region51: #{odenet_forward_pallas.1} parent=0 // pred_check_branch
    %43 = sbr.rel (0) target = $region53
  $region52: #{odenet_forward_pallas.1} parent=0 // pred_region
    _
  $region53: #{odenet_forward_pallas.1} parent=0 // pred_fallthru
    _
  %v45 = vld [vmem:[%s0] sm:$0xf]
  %v46 = vld [vmem:[%s1] sm:$0xf]
  %v47 = vld [vmem:[%s1 + $0x4] sm:$0xf]
  %v48 = vld [vmem:[%s1 + $0x8] sm:$0xf]
  %v49 = vld [vmem:[%s1 + $0xc] sm:$0xf]
  %v50 = vld [vmem:[%s1 + $0x10] sm:$0xf]
  %v51 = vld [vmem:[%s1 + $0x14] sm:$0xf]
  %v52 = vld [vmem:[%s1 + $0x18] sm:$0xf]
  %v53 = vld [vmem:[%s1 + $0x1c] sm:$0xf]
  %v54 = vld [vmem:[%s1 + $0x20] sm:$0xf]
  %v55 = vld [vmem:[%s1 + $0x24] sm:$0xf]
  %v56 = vld [vmem:[%s1 + $0x28] sm:$0xf]
  %v57 = vld [vmem:[%s1 + $0x2c] sm:$0xf]
  %v58 = vld [vmem:[%s1 + $0x30] sm:$0xf]
  %v59 = vld [vmem:[%s1 + $0x34] sm:$0xf]
  %v60 = vld [vmem:[%s1 + $0x38] sm:$0xf]
  %v61 = vld [vmem:[%s1 + $0x3c] sm:$0xf]
  %v62 = vld [vmem:[%s2] sm:$0x1]
  %v64 = vlaneseq
  %v65 = vshrl.u32 %v64, 7
  %v66 = vsub.s32 0, %v65
  %v67 = vrot.slane %v62, %v66
  %v85 = vunpack.c.l.b16 %v46
  %v86 = vunpack.c.l.b16 %v47
  %v87 = vunpack.c.l.b16 %v48
  %v88 = vunpack.c.l.b16 %v49
  %v89 = vunpack.c.l.b16 %v50
  %v90 = vunpack.c.l.b16 %v51
  %v91 = vunpack.c.l.b16 %v52
  %v92 = vunpack.c.l.b16 %v53
  %v93 = vunpack.c.l.b16 %v54
  %v94 = vunpack.c.l.b16 %v55
  %v95 = vunpack.c.l.b16 %v56
  %v96 = vunpack.c.l.b16 %v57
  %v97 = vunpack.c.l.b16 %v58
  %v98 = vunpack.c.l.b16 %v59
  %v99 = vunpack.c.l.b16 %v60
  %v100 = vunpack.c.l.b16 %v61
  %v101 = vpack.c.b16 %v86, %v85
  %v102 = vpack.c.b16 %v88, %v87
  %v103 = vpack.c.b16 %v90, %v89
  %v104 = vpack.c.b16 %v92, %v91
  %v105 = vpack.c.b16 %v94, %v93
  %v106 = vpack.c.b16 %v96, %v95
  %v107 = vpack.c.b16 %v98, %v97
  %v108 = vpack.c.b16 %v100, %v99
  %117 = vmatprep.subr.bf16.mxu0 0
  %118 = vmatpush1.bf16.msra.mxu0 %v101
  %119 = vmatprep.subr.bf16.mxu0 0
  %120 = vmatpush1.bf16.msra.mxu0 %v102
  %121 = vmatprep.subr.bf16.mxu0 0
  %122 = vmatpush1.bf16.msra.mxu0 %v103
  %123 = vmatprep.subr.bf16.mxu0 0
  %124 = vmatpush1.bf16.msra.mxu0 %v104
  %125 = vmatprep.subr.bf16.mxu0 0
  %126 = vmatpush1.bf16.msra.mxu0 %v105
  %127 = vmatprep.subr.bf16.mxu0 0
  %128 = vmatpush1.bf16.msra.mxu0 %v106
  %129 = vmatprep.subr.bf16.mxu0 0
  %130 = vmatpush1.bf16.msra.mxu0 %v107
  %131 = vmatprep.subr.bf16.mxu0 0
  %132 = vmatpush1.bf16.msra.mxu0 %v108
  %133 = vmatprep.subr.bf16.mxu0 0
  %134 = vmatpush1.bf16.msra.mxu0 0
  %135 = vmatprep.subr.bf16.mxu0 0
  %136 = vmatpush1.bf16.msra.mxu0 0
  %137 = vmatprep.subr.bf16.mxu0 0
  %138 = vmatpush1.bf16.msra.mxu0 0
  %139 = vmatprep.subr.bf16.mxu0 0
  %140 = vmatpush1.bf16.msra.mxu0 0
  %141 = vmatprep.subr.bf16.mxu0 0
  %142 = vmatpush1.bf16.msra.mxu0 0
  %143 = vmatprep.subr.bf16.mxu0 0
  %144 = vmatpush1.bf16.msra.mxu0 0
  %145 = vmatprep.subr.bf16.mxu0 0
  %146 = vmatpush1.bf16.msra.mxu0 0
  %147 = vmatprep.subr.bf16.mxu0 0
  %148 = vmatpush1.bf16.msra.mxu0 0
  %149 = vmatprep.mubr.bf16.mxu0 0
  %150 = vmatmul.mubr.bf16.gmra.mrb[0].mxu0 %v45
  %v151 = vpop.f32.mrb[0].mxu0
  %v152 = vadd.f32 %v67, %v151
  %v153 = vpop.f32.mrb[0].mxu0
  %v154 = vpop.f32.mrb[0].mxu0
  %v155 = vpop.f32.mrb[0].mxu0
  %156 = vdwg.mxu0
  %v157 = vpack.c.bf16 %v152, %v152
  %v158 = vld [vmem:[%s3] sm:$0xf]
  %v159 = vld [vmem:[%s3 + $0x4] sm:$0xf]
  %v160 = vld [vmem:[%s3 + $0x8] sm:$0xf]
  %v161 = vld [vmem:[%s3 + $0xc] sm:$0xf]
  %v162 = vld [vmem:[%s3 + $0x10] sm:$0xf]
  %v163 = vld [vmem:[%s3 + $0x14] sm:$0xf]
  %v164 = vld [vmem:[%s3 + $0x18] sm:$0xf]
  %v165 = vld [vmem:[%s3 + $0x1c] sm:$0xf]
  %v166 = vld [vmem:[%s3 + $0x20] sm:$0xf]
  %v167 = vld [vmem:[%s3 + $0x24] sm:$0xf]
  %v168 = vld [vmem:[%s3 + $0x28] sm:$0xf]
  %v169 = vld [vmem:[%s3 + $0x2c] sm:$0xf]
  %v170 = vld [vmem:[%s3 + $0x30] sm:$0xf]
  %v171 = vld [vmem:[%s3 + $0x34] sm:$0xf]
  %v172 = vld [vmem:[%s3 + $0x38] sm:$0xf]
  %v173 = vld [vmem:[%s3 + $0x3c] sm:$0xf]
  %v174 = vld [vmem:[%s4] sm:$0x1]
  %v176 = vlaneseq
  %v177 = vshrl.u32 %v176, 7
  %v178 = vsub.s32 0, %v177
  %v179 = vrot.slane %v174, %v178
  %v197 = vunpack.c.l.b16 %v158
  %v198 = vunpack.c.l.b16 %v159
  %v199 = vunpack.c.l.b16 %v160
  %v200 = vunpack.c.l.b16 %v161
  %v201 = vunpack.c.l.b16 %v162
  %v202 = vunpack.c.l.b16 %v163
  %v203 = vunpack.c.l.b16 %v164
  %v204 = vunpack.c.l.b16 %v165
  %v205 = vunpack.c.l.b16 %v166
  %v206 = vunpack.c.l.b16 %v167
  %v207 = vunpack.c.l.b16 %v168
  %v208 = vunpack.c.l.b16 %v169
  %v209 = vunpack.c.l.b16 %v170
  %v210 = vunpack.c.l.b16 %v171
  %v211 = vunpack.c.l.b16 %v172
  %v212 = vunpack.c.l.b16 %v173
  %v213 = vpack.c.b16 %v198, %v197
  %v214 = vpack.c.b16 %v200, %v199
  %v215 = vpack.c.b16 %v202, %v201
  %v216 = vpack.c.b16 %v204, %v203
  %v217 = vpack.c.b16 %v206, %v205
  %v218 = vpack.c.b16 %v208, %v207
  %v219 = vpack.c.b16 %v210, %v209
  %v220 = vpack.c.b16 %v212, %v211
  %229 = vmatprep.subr.bf16.mxu0 0
  %230 = vmatpush1.bf16.msra.mxu0 %v213
  %231 = vmatprep.subr.bf16.mxu0 0
  %232 = vmatpush1.bf16.msra.mxu0 %v214
  %233 = vmatprep.subr.bf16.mxu0 0
  %234 = vmatpush1.bf16.msra.mxu0 %v215
  %235 = vmatprep.subr.bf16.mxu0 0
  %236 = vmatpush1.bf16.msra.mxu0 %v216
  %237 = vmatprep.subr.bf16.mxu0 0
  %238 = vmatpush1.bf16.msra.mxu0 %v217
  %239 = vmatprep.subr.bf16.mxu0 0
  %240 = vmatpush1.bf16.msra.mxu0 %v218
  %241 = vmatprep.subr.bf16.mxu0 0
  %242 = vmatpush1.bf16.msra.mxu0 %v219
  %243 = vmatprep.subr.bf16.mxu0 0
  %244 = vmatpush1.bf16.msra.mxu0 %v220
  %245 = vmatprep.subr.bf16.mxu0 0
  %246 = vmatpush1.bf16.msra.mxu0 0
  %247 = vmatprep.subr.bf16.mxu0 0
  %248 = vmatpush1.bf16.msra.mxu0 0
  %249 = vmatprep.subr.bf16.mxu0 0
  %250 = vmatpush1.bf16.msra.mxu0 0
  %251 = vmatprep.subr.bf16.mxu0 0
  %252 = vmatpush1.bf16.msra.mxu0 0
  %253 = vmatprep.subr.bf16.mxu0 0
  %254 = vmatpush1.bf16.msra.mxu0 0
  %255 = vmatprep.subr.bf16.mxu0 0
  %256 = vmatpush1.bf16.msra.mxu0 0
  %257 = vmatprep.subr.bf16.mxu0 0
  %258 = vmatpush1.bf16.msra.mxu0 0
  %259 = vmatprep.subr.bf16.mxu0 0
  %260 = vmatpush1.bf16.msra.mxu0 0
  %261 = vmatprep.mubr.bf16.mxu0 0
  %262 = vmatmul.mubr.bf16.gmra.mrb[0].mxu0 %v157
  %v263 = vpop.f32.mrb[0].mxu0
  %v264 = vadd.f32 %v179, %v263
  %v265 = vpop.f32.mrb[0].mxu0
  %v266 = vpop.f32.mrb[0].mxu0
  %v267 = vpop.f32.mrb[0].mxu0
  %268 = vdwg.mxu0
  %vm269 = vcmp.gt.f32.partialorder %v264, 0.0
  %v270 = vmul.f32 %v264, 1.442695
  %v271 = vpow.pop %v270
  %v272 = vsub.f32 %v271, 1.0
  %v273 = vsel %vm269, %v264, %v272
  %v274 = vpack.c.bf16 %v273, %v273
  %v275 = vld [vmem:[%s5] sm:$0xf]
  %v276 = vld [vmem:[%s5 + $0x4] sm:$0xf]
  %v277 = vld [vmem:[%s5 + $0x8] sm:$0xf]
  %v278 = vld [vmem:[%s5 + $0xc] sm:$0xf]
  %v279 = vld [vmem:[%s5 + $0x10] sm:$0xf]
  %v280 = vld [vmem:[%s5 + $0x14] sm:$0xf]
  %v281 = vld [vmem:[%s5 + $0x18] sm:$0xf]
  %v282 = vld [vmem:[%s5 + $0x1c] sm:$0xf]
  %v283 = vld [vmem:[%s5 + $0x20] sm:$0xf]
  %v284 = vld [vmem:[%s5 + $0x24] sm:$0xf]
  %v285 = vld [vmem:[%s5 + $0x28] sm:$0xf]
  %v286 = vld [vmem:[%s5 + $0x2c] sm:$0xf]
  %v287 = vld [vmem:[%s5 + $0x30] sm:$0xf]
  %v288 = vld [vmem:[%s5 + $0x34] sm:$0xf]
  %v289 = vld [vmem:[%s5 + $0x38] sm:$0xf]
  %v290 = vld [vmem:[%s5 + $0x3c] sm:$0xf]
  %v291 = vld [vmem:[%s6] sm:$0x1]
  %v293 = vlaneseq
  %v294 = vshrl.u32 %v293, 7
  %v295 = vsub.s32 0, %v294
  %v296 = vrot.slane %v291, %v295
  %v314 = vunpack.c.l.b16 %v275
  %v315 = vunpack.c.l.b16 %v276
  %v316 = vunpack.c.l.b16 %v277
  %v317 = vunpack.c.l.b16 %v278
  %v318 = vunpack.c.l.b16 %v279
  %v319 = vunpack.c.l.b16 %v280
  %v320 = vunpack.c.l.b16 %v281
  %v321 = vunpack.c.l.b16 %v282
  %v322 = vunpack.c.l.b16 %v283
  %v323 = vunpack.c.l.b16 %v284
  %v324 = vunpack.c.l.b16 %v285
  %v325 = vunpack.c.l.b16 %v286
  %v326 = vunpack.c.l.b16 %v287
  %v327 = vunpack.c.l.b16 %v288
  %v328 = vunpack.c.l.b16 %v289
  %v329 = vunpack.c.l.b16 %v290
  %v330 = vpack.c.b16 %v315, %v314
  %v331 = vpack.c.b16 %v317, %v316
  %v332 = vpack.c.b16 %v319, %v318
  %v333 = vpack.c.b16 %v321, %v320
  %v334 = vpack.c.b16 %v323, %v322
  %v335 = vpack.c.b16 %v325, %v324
  %v336 = vpack.c.b16 %v327, %v326
  %v337 = vpack.c.b16 %v329, %v328
  %346 = vmatprep.subr.bf16.mxu0 0
  %347 = vmatpush1.bf16.msra.mxu0 %v330
  %348 = vmatprep.subr.bf16.mxu0 0
  %349 = vmatpush1.bf16.msra.mxu0 %v331
  %350 = vmatprep.subr.bf16.mxu0 0
  %351 = vmatpush1.bf16.msra.mxu0 %v332
  %352 = vmatprep.subr.bf16.mxu0 0
  %353 = vmatpush1.bf16.msra.mxu0 %v333
  %354 = vmatprep.subr.bf16.mxu0 0
  %355 = vmatpush1.bf16.msra.mxu0 %v334
  %356 = vmatprep.subr.bf16.mxu0 0
  %357 = vmatpush1.bf16.msra.mxu0 %v335
  %358 = vmatprep.subr.bf16.mxu0 0
  %359 = vmatpush1.bf16.msra.mxu0 %v336
  %360 = vmatprep.subr.bf16.mxu0 0
  %361 = vmatpush1.bf16.msra.mxu0 %v337
  %362 = vmatprep.subr.bf16.mxu0 0
  %363 = vmatpush1.bf16.msra.mxu0 0
  %364 = vmatprep.subr.bf16.mxu0 0
  %365 = vmatpush1.bf16.msra.mxu0 0
  %366 = vmatprep.subr.bf16.mxu0 0
  %367 = vmatpush1.bf16.msra.mxu0 0
  %368 = vmatprep.subr.bf16.mxu0 0
  %369 = vmatpush1.bf16.msra.mxu0 0
  %370 = vmatprep.subr.bf16.mxu0 0
  %371 = vmatpush1.bf16.msra.mxu0 0
  %372 = vmatprep.subr.bf16.mxu0 0
  %373 = vmatpush1.bf16.msra.mxu0 0
  %374 = vmatprep.subr.bf16.mxu0 0
  %375 = vmatpush1.bf16.msra.mxu0 0
  %376 = vmatprep.subr.bf16.mxu0 0
  %377 = vmatpush1.bf16.msra.mxu0 0
  %378 = vmatprep.mubr.bf16.mxu0 0
  %379 = vmatmul.mubr.bf16.gmra.mrb[0].mxu0 %v274
  %v380 = vpop.f32.mrb[0].mxu0
  %v381 = vadd.f32 %v296, %v380
  %v382 = vpop.f32.mrb[0].mxu0
  %v383 = vpop.f32.mrb[0].mxu0
  %v384 = vpop.f32.mrb[0].mxu0
  %385 = vdwg.mxu0
  %v386 = vadd.f32 %v152, %v381
  %v387 = vpack.c.bf16 %v386, %v386
  %v388 = vld [vmem:[%s7] sm:$0xf]
  %v389 = vld [vmem:[%s7 + $0x4] sm:$0xf]
  %v390 = vld [vmem:[%s7 + $0x8] sm:$0xf]
  %v391 = vld [vmem:[%s7 + $0xc] sm:$0xf]
  %v392 = vld [vmem:[%s7 + $0x10] sm:$0xf]
  %v393 = vld [vmem:[%s7 + $0x14] sm:$0xf]
  %v394 = vld [vmem:[%s7 + $0x18] sm:$0xf]
  %v395 = vld [vmem:[%s7 + $0x1c] sm:$0xf]
  %v396 = vld [vmem:[%s7 + $0x20] sm:$0xf]
  %v397 = vld [vmem:[%s7 + $0x24] sm:$0xf]
  %v398 = vld [vmem:[%s7 + $0x28] sm:$0xf]
  %v399 = vld [vmem:[%s7 + $0x2c] sm:$0xf]
  %v400 = vld [vmem:[%s7 + $0x30] sm:$0xf]
  %v401 = vld [vmem:[%s7 + $0x34] sm:$0xf]
  %v402 = vld [vmem:[%s7 + $0x38] sm:$0xf]
  %v403 = vld [vmem:[%s7 + $0x3c] sm:$0xf]
  %v404 = vld [vmem:[%s8] sm:$0x1]
  %v406 = vlaneseq
  %v407 = vshrl.u32 %v406, 7
  %v408 = vsub.s32 0, %v407
  %v409 = vrot.slane %v404, %v408
  %v427 = vunpack.c.l.b16 %v388
  %v428 = vunpack.c.l.b16 %v389
  %v429 = vunpack.c.l.b16 %v390
  %v430 = vunpack.c.l.b16 %v391
  %v431 = vunpack.c.l.b16 %v392
  %v432 = vunpack.c.l.b16 %v393
  %v433 = vunpack.c.l.b16 %v394
  %v434 = vunpack.c.l.b16 %v395
  %v435 = vunpack.c.l.b16 %v396
  %v436 = vunpack.c.l.b16 %v397
  %v437 = vunpack.c.l.b16 %v398
  %v438 = vunpack.c.l.b16 %v399
  %v439 = vunpack.c.l.b16 %v400
  %v440 = vunpack.c.l.b16 %v401
  %v441 = vunpack.c.l.b16 %v402
  %v442 = vunpack.c.l.b16 %v403
  %v443 = vpack.c.b16 %v428, %v427
  %v444 = vpack.c.b16 %v430, %v429
  %v445 = vpack.c.b16 %v432, %v431
  %v446 = vpack.c.b16 %v434, %v433
  %v447 = vpack.c.b16 %v436, %v435
  %v448 = vpack.c.b16 %v438, %v437
  %v449 = vpack.c.b16 %v440, %v439
  %v450 = vpack.c.b16 %v442, %v441
  %459 = vmatprep.subr.bf16.mxu0 0
  %460 = vmatpush1.bf16.msra.mxu0 %v443
  %461 = vmatprep.subr.bf16.mxu0 0
  %462 = vmatpush1.bf16.msra.mxu0 %v444
  %463 = vmatprep.subr.bf16.mxu0 0
  %464 = vmatpush1.bf16.msra.mxu0 %v445
  %465 = vmatprep.subr.bf16.mxu0 0
  %466 = vmatpush1.bf16.msra.mxu0 %v446
  %467 = vmatprep.subr.bf16.mxu0 0
  %468 = vmatpush1.bf16.msra.mxu0 %v447
  %469 = vmatprep.subr.bf16.mxu0 0
  %470 = vmatpush1.bf16.msra.mxu0 %v448
  %471 = vmatprep.subr.bf16.mxu0 0
  %472 = vmatpush1.bf16.msra.mxu0 %v449
  %473 = vmatprep.subr.bf16.mxu0 0
  %474 = vmatpush1.bf16.msra.mxu0 %v450
  %475 = vmatprep.subr.bf16.mxu0 0
  %476 = vmatpush1.bf16.msra.mxu0 0
  %477 = vmatprep.subr.bf16.mxu0 0
  %478 = vmatpush1.bf16.msra.mxu0 0
  %479 = vmatprep.subr.bf16.mxu0 0
  %480 = vmatpush1.bf16.msra.mxu0 0
  %481 = vmatprep.subr.bf16.mxu0 0
  %482 = vmatpush1.bf16.msra.mxu0 0
  %483 = vmatprep.subr.bf16.mxu0 0
  %484 = vmatpush1.bf16.msra.mxu0 0
  %485 = vmatprep.subr.bf16.mxu0 0
  %486 = vmatpush1.bf16.msra.mxu0 0
  %487 = vmatprep.subr.bf16.mxu0 0
  %488 = vmatpush1.bf16.msra.mxu0 0
  %489 = vmatprep.subr.bf16.mxu0 0
  %490 = vmatpush1.bf16.msra.mxu0 0
  %491 = vmatprep.mubr.bf16.mxu0 0
  %492 = vmatmul.mubr.bf16.gmra.mrb[0].mxu0 %v387
  %v493 = vpop.f32.mrb[0].mxu0
  %v494 = vadd.f32 %v409, %v493
  %v495 = vpop.f32.mrb[0].mxu0
  %v496 = vpop.f32.mrb[0].mxu0
  %v497 = vpop.f32.mrb[0].mxu0
  %498 = vdwg.mxu0
  %vm499 = vcmp.gt.f32.partialorder %v494, 0.0
  %v500 = vmul.f32 %v494, 1.442695
  %v501 = vpow.pop %v500
  %v502 = vsub.f32 %v501, 1.0
  %v503 = vsel %vm499, %v494, %v502
  %v504 = vpack.c.bf16 %v503, %v503
  %v505 = vld [vmem:[%s9] sm:$0xf]
  %v506 = vld [vmem:[%s9 + $0x4] sm:$0xf]
  %v507 = vld [vmem:[%s9 + $0x8] sm:$0xf]
  %v508 = vld [vmem:[%s9 + $0xc] sm:$0xf]
  %v509 = vld [vmem:[%s9 + $0x10] sm:$0xf]
  %v510 = vld [vmem:[%s9 + $0x14] sm:$0xf]
  %v511 = vld [vmem:[%s9 + $0x18] sm:$0xf]
  %v512 = vld [vmem:[%s9 + $0x1c] sm:$0xf]
  %v513 = vld [vmem:[%s9 + $0x20] sm:$0xf]
  %v514 = vld [vmem:[%s9 + $0x24] sm:$0xf]
  %v515 = vld [vmem:[%s9 + $0x28] sm:$0xf]
  %v516 = vld [vmem:[%s9 + $0x2c] sm:$0xf]
  %v517 = vld [vmem:[%s9 + $0x30] sm:$0xf]
  %v518 = vld [vmem:[%s9 + $0x34] sm:$0xf]
  %v519 = vld [vmem:[%s9 + $0x38] sm:$0xf]
  %v520 = vld [vmem:[%s9 + $0x3c] sm:$0xf]
  %v521 = vld [vmem:[%s10] sm:$0x1]
  %v523 = vlaneseq
  %v524 = vshrl.u32 %v523, 7
  %v525 = vsub.s32 0, %v524
  %v526 = vrot.slane %v521, %v525
  %v544 = vunpack.c.l.b16 %v505
  %v545 = vunpack.c.l.b16 %v506
  %v546 = vunpack.c.l.b16 %v507
  %v547 = vunpack.c.l.b16 %v508
  %v548 = vunpack.c.l.b16 %v509
  %v549 = vunpack.c.l.b16 %v510
  %v550 = vunpack.c.l.b16 %v511
  %v551 = vunpack.c.l.b16 %v512
  %v552 = vunpack.c.l.b16 %v513
  %v553 = vunpack.c.l.b16 %v514
  %v554 = vunpack.c.l.b16 %v515
  %v555 = vunpack.c.l.b16 %v516
  %v556 = vunpack.c.l.b16 %v517
  %v557 = vunpack.c.l.b16 %v518
  %v558 = vunpack.c.l.b16 %v519
  %v559 = vunpack.c.l.b16 %v520
  %v560 = vpack.c.b16 %v545, %v544
  %v561 = vpack.c.b16 %v547, %v546
  %v562 = vpack.c.b16 %v549, %v548
  %v563 = vpack.c.b16 %v551, %v550
  %v564 = vpack.c.b16 %v553, %v552
  %v565 = vpack.c.b16 %v555, %v554
  %v566 = vpack.c.b16 %v557, %v556
  %v567 = vpack.c.b16 %v559, %v558
  %576 = vmatprep.subr.bf16.mxu0 0
  %577 = vmatpush1.bf16.msra.mxu0 %v560
  %578 = vmatprep.subr.bf16.mxu0 0
  %579 = vmatpush1.bf16.msra.mxu0 %v561
  %580 = vmatprep.subr.bf16.mxu0 0
  %581 = vmatpush1.bf16.msra.mxu0 %v562
  %582 = vmatprep.subr.bf16.mxu0 0
  %583 = vmatpush1.bf16.msra.mxu0 %v563
  %584 = vmatprep.subr.bf16.mxu0 0
  %585 = vmatpush1.bf16.msra.mxu0 %v564
  %586 = vmatprep.subr.bf16.mxu0 0
  %587 = vmatpush1.bf16.msra.mxu0 %v565
  %588 = vmatprep.subr.bf16.mxu0 0
  %589 = vmatpush1.bf16.msra.mxu0 %v566
  %590 = vmatprep.subr.bf16.mxu0 0
  %591 = vmatpush1.bf16.msra.mxu0 %v567
  %592 = vmatprep.subr.bf16.mxu0 0
  %593 = vmatpush1.bf16.msra.mxu0 0
  %594 = vmatprep.subr.bf16.mxu0 0
  %595 = vmatpush1.bf16.msra.mxu0 0
  %596 = vmatprep.subr.bf16.mxu0 0
  %597 = vmatpush1.bf16.msra.mxu0 0
  %598 = vmatprep.subr.bf16.mxu0 0
  %599 = vmatpush1.bf16.msra.mxu0 0
  %600 = vmatprep.subr.bf16.mxu0 0
  %601 = vmatpush1.bf16.msra.mxu0 0
  %602 = vmatprep.subr.bf16.mxu0 0
  %603 = vmatpush1.bf16.msra.mxu0 0
  %604 = vmatprep.subr.bf16.mxu0 0
  %605 = vmatpush1.bf16.msra.mxu0 0
  %606 = vmatprep.subr.bf16.mxu0 0
  %607 = vmatpush1.bf16.msra.mxu0 0
  %608 = vmatprep.mubr.bf16.mxu0 0
  %609 = vmatmul.mubr.bf16.gmra.mrb[0].mxu0 %v504
  %v610 = vpop.f32.mrb[0].mxu0
  %v611 = vadd.f32 %v526, %v610
  %v612 = vpop.f32.mrb[0].mxu0
  %v613 = vpop.f32.mrb[0].mxu0
  %v614 = vpop.f32.mrb[0].mxu0
  %615 = vdwg.mxu0
  %v616 = vadd.f32 %v386, %v611
  %v617 = vpack.c.bf16 %v616, %v616
  %v618 = vld [vmem:[%s11] sm:$0xf]
  %v619 = vld [vmem:[%s11 + $0x4] sm:$0xf]
  %v620 = vld [vmem:[%s11 + $0x8] sm:$0xf]
  %v621 = vld [vmem:[%s11 + $0xc] sm:$0xf]
  %v622 = vld [vmem:[%s11 + $0x10] sm:$0xf]
  %v623 = vld [vmem:[%s11 + $0x14] sm:$0xf]
  %v624 = vld [vmem:[%s11 + $0x18] sm:$0xf]
  %v625 = vld [vmem:[%s11 + $0x1c] sm:$0xf]
  %v626 = vld [vmem:[%s11 + $0x20] sm:$0xf]
  %v627 = vld [vmem:[%s11 + $0x24] sm:$0xf]
  %v628 = vld [vmem:[%s11 + $0x28] sm:$0xf]
  %v629 = vld [vmem:[%s11 + $0x2c] sm:$0xf]
  %v630 = vld [vmem:[%s11 + $0x30] sm:$0xf]
  %v631 = vld [vmem:[%s11 + $0x34] sm:$0xf]
  %v632 = vld [vmem:[%s11 + $0x38] sm:$0xf]
  %v633 = vld [vmem:[%s11 + $0x3c] sm:$0xf]
  %v634 = vld [vmem:[%s12] sm:$0x1]
  %v636 = vlaneseq
  %v637 = vshrl.u32 %v636, 7
  %v638 = vsub.s32 0, %v637
  %v639 = vrot.slane %v634, %v638
  %v657 = vunpack.c.l.b16 %v618
  %v658 = vunpack.c.l.b16 %v619
  %v659 = vunpack.c.l.b16 %v620
  %v660 = vunpack.c.l.b16 %v621
  %v661 = vunpack.c.l.b16 %v622
  %v662 = vunpack.c.l.b16 %v623
  %v663 = vunpack.c.l.b16 %v624
  %v664 = vunpack.c.l.b16 %v625
  %v665 = vunpack.c.l.b16 %v626
  %v666 = vunpack.c.l.b16 %v627
  %v667 = vunpack.c.l.b16 %v628
  %v668 = vunpack.c.l.b16 %v629
  %v669 = vunpack.c.l.b16 %v630
  %v670 = vunpack.c.l.b16 %v631
  %v671 = vunpack.c.l.b16 %v632
  %v672 = vunpack.c.l.b16 %v633
  %v673 = vpack.c.b16 %v658, %v657
  %v674 = vpack.c.b16 %v660, %v659
  %v675 = vpack.c.b16 %v662, %v661
  %v676 = vpack.c.b16 %v664, %v663
  %v677 = vpack.c.b16 %v666, %v665
  %v678 = vpack.c.b16 %v668, %v667
  %v679 = vpack.c.b16 %v670, %v669
  %v680 = vpack.c.b16 %v672, %v671
  %689 = vmatprep.subr.bf16.mxu0 0
  %690 = vmatpush1.bf16.msra.mxu0 %v673
  %691 = vmatprep.subr.bf16.mxu0 0
  %692 = vmatpush1.bf16.msra.mxu0 %v674
  %693 = vmatprep.subr.bf16.mxu0 0
  %694 = vmatpush1.bf16.msra.mxu0 %v675
  %695 = vmatprep.subr.bf16.mxu0 0
  %696 = vmatpush1.bf16.msra.mxu0 %v676
  %697 = vmatprep.subr.bf16.mxu0 0
  %698 = vmatpush1.bf16.msra.mxu0 %v677
  %699 = vmatprep.subr.bf16.mxu0 0
  %700 = vmatpush1.bf16.msra.mxu0 %v678
  %701 = vmatprep.subr.bf16.mxu0 0
  %702 = vmatpush1.bf16.msra.mxu0 %v679
  %703 = vmatprep.subr.bf16.mxu0 0
  %704 = vmatpush1.bf16.msra.mxu0 %v680
  %705 = vmatprep.subr.bf16.mxu0 0
  %706 = vmatpush1.bf16.msra.mxu0 0
  %707 = vmatprep.subr.bf16.mxu0 0
  %708 = vmatpush1.bf16.msra.mxu0 0
  %709 = vmatprep.subr.bf16.mxu0 0
  %710 = vmatpush1.bf16.msra.mxu0 0
  %711 = vmatprep.subr.bf16.mxu0 0
  %712 = vmatpush1.bf16.msra.mxu0 0
  %713 = vmatprep.subr.bf16.mxu0 0
  %714 = vmatpush1.bf16.msra.mxu0 0
  %715 = vmatprep.subr.bf16.mxu0 0
  %716 = vmatpush1.bf16.msra.mxu0 0
  %717 = vmatprep.subr.bf16.mxu0 0
  %718 = vmatpush1.bf16.msra.mxu0 0
  %719 = vmatprep.subr.bf16.mxu0 0
  %720 = vmatpush1.bf16.msra.mxu0 0
  %721 = vmatprep.mubr.bf16.mxu0 0
  %722 = vmatmul.mubr.bf16.gmra.mrb[0].mxu0 %v617
  %v723 = vpop.f32.mrb[0].mxu0
  %v724 = vadd.f32 %v639, %v723
  %v725 = vpop.f32.mrb[0].mxu0
  %v726 = vpop.f32.mrb[0].mxu0
  %v727 = vpop.f32.mrb[0].mxu0
  %728 = vdwg.mxu0
  %729 = vst [vmem:[%s13] sm:$0xff] %v724
  // Predicated region
  $region54: #{odenet_forward_pallas.1} parent=0 // pred_check
    _
  $region55: #{odenet_forward_pallas.1} parent=0 // pred_check_branch
    %731 = sbr.rel (0) target = $region57
  $region56: #{odenet_forward_pallas.1} parent=0 // pred_region
    _
  $region57: #{odenet_forward_pallas.1} parent=0 // pred_fallthru
    _
  // Predicated region
  $region58: #{odenet_forward_pallas.1} parent=0 // pred_check
    _
  $region59: #{odenet_forward_pallas.1} parent=0 // pred_check_branch
    %733 = sbr.rel (0) target = $region61
  $region60: #{odenet_forward_pallas.1} parent=0 // pred_region
    _
  $region61: #{odenet_forward_pallas.1} parent=0 // pred_fallthru
    _

</llo_original>
